<compile_context>
chip_gen: v7x
topology: tpu7x:2x2x1
jax: 0.10.0
libtpu: 0.0.40
codegen_flags: <defaults>
</compile_context>

<pallas_src>
import functools

import jax
import jax.numpy as jnp
from jax.experimental import pallas as pl
from jax.experimental.pallas import tpu as pltpu


def _gaussian_filter_kernel(art_ref, ait_ref, ar_ref, ai_ref, img_ref, out_ref,
                            *, bt, n):
    """One grid step: filter a tile of BT images stacked as a (BT*N, N) slab."""
    x = img_ref[...]                       # (BT*N, N) row-stacked real images
    art = art_ref[...]                     # Ar^T
    ait = ait_ref[...]                     # Ai^T

    # Column-side transform for the whole tile at once (tall MXU matmuls):
    #   Ur[b] = X[b] @ Ar^T ,  Ui[b] = X[b] @ Ai^T
    ur = jnp.dot(x, art, preferred_element_type=jnp.float32)   # (BT*N, N)
    ui = jnp.dot(x, ait, preferred_element_type=jnp.float32)   # (BT*N, N)

    ar = ar_ref[...]
    ai = ai_ref[...]

    # Row-side transform per image:  out[b] = Ar @ Ur[b] - Ai @ Ui[b]
    for t in range(bt):                    # static unroll (bt is small)
        lo = t * n
        hi = lo + n
        o = (jnp.dot(ar, ur[lo:hi, :], preferred_element_type=jnp.float32)
             - jnp.dot(ai, ui[lo:hi, :], preferred_element_type=jnp.float32))
        out_ref[lo:hi, :] = o.astype(out_ref.dtype)


def _filter_matrix(band, sidelen):
    """A = IDFT @ diag(ifftshift(g)) @ DFT, returned as f32 (real, imag)."""
    n = sidelen
    k = jnp.arange(n, dtype=jnp.float32)
    theta = (-2.0 * jnp.pi / n) * jnp.outer(k, k)
    wr = jnp.cos(theta)                    # forward DFT, real part
    wi = jnp.sin(theta)                    # forward DFT, imag part
    vr = wr / n                            # inverse DFT, real part
    vi = -wi / n                           # inverse DFT, imag part

    # 1-D Gaussian on the same (non-canonical) torch.linspace(0, N, N) grid
    # the PyTorch module uses (spacing N/(N-1), mean = N/2).  This is
    # intentional parity with the module -- do NOT "fix" it to fftfreq.
    lin = jnp.linspace(0.0, float(n), n, dtype=jnp.float32)
    sigma = jnp.asarray(band, jnp.float32) * n / 3.0
    g = jnp.exp(-((lin - n / 2.0) ** 2) / (2.0 * sigma * sigma))
    gs = jnp.fft.ifftshift(g)              # pre-shift: no shifts in-kernel

    hp = jax.lax.Precision.HIGHEST
    pr = vr * gs[None, :]
    pi = vi * gs[None, :]
    ar = jnp.dot(pr, wr, precision=hp) - jnp.dot(pi, wi, precision=hp)
    ai = jnp.dot(pr, wi, precision=hp) + jnp.dot(pi, wr, precision=hp)
    return ar.astype(jnp.float32), ai.astype(jnp.float32)


def gaussian_filter(img, band, sidelen, block_batch=None):
    """img: (B, N, N) float32, band: python/0-d float scalar."""
    b, h, w = img.shape
    assert h == sidelen and w == sidelen
    n = sidelen

    # Complex filter matrix built once per call (plain JAX, jit-friendly).
    ar, ai = _filter_matrix(band, n)
    art = ar.T
    ait = ai.T

    # Batch tile: tall (BT*N, N) slab per grid step; cap the static unroll.
    if block_batch is None:
        bt = max(1, min(b, 1024 // n, 64))
    else:
        bt = max(1, min(int(block_batch), b))
    n_steps = -(-b // bt)
    bp = n_steps * bt

    x = img.astype(jnp.float32)
    if bp != b:
        x = jnp.pad(x, ((0, bp - b), (0, 0), (0, 0)))
    x2 = x.reshape(bp * n, n)              # free (metadata-only) reshape

    mat_spec = pl.BlockSpec((n, n), lambda g: (0, 0))   # loop-invariant consts
    out2 = pl.pallas_call(
        functools.partial(_gaussian_filter_kernel, bt=bt, n=n),
        out_shape=jax.ShapeDtypeStruct((bp * n, n), jnp.float32),
        grid_spec=pltpu.PrefetchScalarGridSpec(
            num_scalar_prefetch=0,
            grid=(n_steps,),
            in_specs=[mat_spec, mat_spec, mat_spec, mat_spec,
                      pl.BlockSpec((bt * n, n), lambda g: (g, 0))],
            out_specs=pl.BlockSpec((bt * n, n), lambda g: (g, 0)),
        ),
        compiler_params=pltpu.CompilerParams(
            dimension_semantics=("parallel",)),   # shards batch grid across TCs
    )(art, ait, ar, ai, x2)

    out = out2.reshape(bp, n, n)
    if bp != b:
        out = out[:b]
    return out


def _reference(img, band, sidelen):
    """Pure-JAX reproduction of the PyTorch forward (for verification)."""
    n = sidelen
    fft_img = jnp.fft.fftshift(jnp.fft.fft2(img), axes=(-2, -1))
    sigma = band * n / 3.0
    mean = n / 2.0
    lin = jnp.linspace(0.0, float(n), n)
    xg, yg = jnp.meshgrid(lin, lin, indexing="ij")
    gmask = jnp.exp(-((xg - mean) ** 2 / (2 * sigma ** 2)
                      + (yg - mean) ** 2 / (2 * sigma ** 2)))
    filtered = fft_img * gmask[None, :, :]
    out = jnp.fft.ifft2(jnp.fft.ifftshift(filtered, axes=(-2, -1)))
    return out.real


if __name__ == "__main__":
    sidelen = 16
    batch = 10
    band = 0.5

    key = jax.random.PRNGKey(0)
    img = jax.random.normal(key, (batch, sidelen, sidelen), dtype=jnp.float32)

    # block_batch=4 -> 3 grid steps, exercises the batch-padding path too.
    out = gaussian_filter(img, band, sidelen, block_batch=4)
    out = jax.block_until_ready(out)

    ref = jax.block_until_ready(_reference(img, band, sidelen).astype(jnp.float32))
    assert out.shape == (batch, sidelen, sidelen)
    assert jnp.allclose(out, ref, atol=1e-3, rtol=1e-3), "mismatch vs reference"

    print("KERNEL_OK")
</pallas_src>

<mosaic_0001>
module attributes {stable_mosaic.version = 11 : i64} {
  func.func @_gaussian_filter_kernel(%arg0: i32, %arg1: memref<16x16xf32, #tpu.memory_space<vmem>>, %arg2: memref<16x16xf32, #tpu.memory_space<vmem>>, %arg3: memref<16x16xf32, #tpu.memory_space<vmem>>, %arg4: memref<16x16xf32, #tpu.memory_space<vmem>>, %arg5: memref<64x16xf32, #tpu.memory_space<vmem>>, %arg6: memref<64x16xf32, #tpu.memory_space<vmem>>) attributes {dimension_semantics = [#tpu.dimension_semantics<parallel>], iteration_bounds = array<i64: 3>, scalar_prefetch = 0 : i64, scratch_operands = 0 : i64, tpu.core_type = #tpu.core_type<tc>, window_params = [{pipeline_mode = #tpu.pipeline_mode<synchronous>, transform_indices = @transform_0, window_bounds = array<i64: 16, 16>}, {pipeline_mode = #tpu.pipeline_mode<synchronous>, transform_indices = @transform_1, window_bounds = array<i64: 16, 16>}, {pipeline_mode = #tpu.pipeline_mode<synchronous>, transform_indices = @transform_2, window_bounds = array<i64: 16, 16>}, {pipeline_mode = #tpu.pipeline_mode<synchronous>, transform_indices = @transform_3, window_bounds = array<i64: 16, 16>}, {transform_indices = @transform_4, window_bounds = array<i64: 64, 16>}, {transform_indices = @transform_5, window_bounds = array<i64: 64, 16>}]} {
    %c0 = arith.constant 0 : index
    %c0_0 = arith.constant 0 : index
    %0 = vector.load %arg5[%c0, %c0_0] : memref<64x16xf32, #tpu.memory_space<vmem>>, vector<64x16xf32>
    %c0_1 = arith.constant 0 : index
    %c0_2 = arith.constant 0 : index
    %1 = vector.load %arg1[%c0_1, %c0_2] : memref<16x16xf32, #tpu.memory_space<vmem>>, vector<16x16xf32>
    %c0_3 = arith.constant 0 : index
    %c0_4 = arith.constant 0 : index
    %2 = vector.load %arg2[%c0_3, %c0_4] : memref<16x16xf32, #tpu.memory_space<vmem>>, vector<16x16xf32>
    %cst = arith.constant dense<0.000000e+00> : vector<64x16xf32>
    %3 = tpu.matmul %0, %1, %cst {dimension_numbers = #tpu.dot_dimension_numbers<[1], [0], [0], [1], [0, 0, 1, 1], [], []>} : vector<64x16xf32>, vector<16x16xf32>, vector<64x16xf32> -> vector<64x16xf32>
    %cst_5 = arith.constant dense<0.000000e+00> : vector<64x16xf32>
    %4 = tpu.matmul %0, %2, %cst_5 {dimension_numbers = #tpu.dot_dimension_numbers<[1], [0], [0], [1], [0, 0, 1, 1], [], []>} : vector<64x16xf32>, vector<16x16xf32>, vector<64x16xf32> -> vector<64x16xf32>
    %c0_6 = arith.constant 0 : index
    %c0_7 = arith.constant 0 : index
    %5 = vector.load %arg3[%c0_6, %c0_7] : memref<16x16xf32, #tpu.memory_space<vmem>>, vector<16x16xf32>
    %c0_8 = arith.constant 0 : index
    %c0_9 = arith.constant 0 : index
    %6 = vector.load %arg4[%c0_8, %c0_9] : memref<16x16xf32, #tpu.memory_space<vmem>>, vector<16x16xf32>
    %7 = vector.extract_strided_slice %3 {offsets = [0, 0], sizes = [16, 16], strides = [1, 1]} : vector<64x16xf32> to vector<16x16xf32>
    %cst_10 = arith.constant dense<0.000000e+00> : vector<16x16xf32>
    %8 = tpu.matmul %5, %7, %cst_10 {dimension_numbers = #tpu.dot_dimension_numbers<[1], [0], [0], [1], [0, 0, 1, 1], [], []>} : vector<16x16xf32>, vector<16x16xf32>, vector<16x16xf32> -> vector<16x16xf32>
    %9 = vector.extract_strided_slice %4 {offsets = [0, 0], sizes = [16, 16], strides = [1, 1]} : vector<64x16xf32> to vector<16x16xf32>
    %cst_11 = arith.constant dense<0.000000e+00> : vector<16x16xf32>
    %10 = tpu.matmul %6, %9, %cst_11 {dimension_numbers = #tpu.dot_dimension_numbers<[1], [0], [0], [1], [0, 0, 1, 1], [], []>} : vector<16x16xf32>, vector<16x16xf32>, vector<16x16xf32> -> vector<16x16xf32>
    %11 = arith.subf %8, %10 : vector<16x16xf32>
    %c0_12 = arith.constant 0 : index
    %c0_13 = arith.constant 0 : index
    %12 = vector.load %arg6[%c0_12, %c0_13] : memref<64x16xf32, #tpu.memory_space<vmem>>, vector<16x16xf32>
    tpu.vector_store %arg6[%c0_12, %c0_13], %11 {strides = array<i32>} : memref<64x16xf32, #tpu.memory_space<vmem>>, vector<16x16xf32>,
    %13 = vector.extract_strided_slice %3 {offsets = [16, 0], sizes = [16, 16], strides = [1, 1]} : vector<64x16xf32> to vector<16x16xf32>
    %cst_14 = arith.constant dense<0.000000e+00> : vector<16x16xf32>
    %14 = tpu.matmul %5, %13, %cst_14 {dimension_numbers = #tpu.dot_dimension_numbers<[1], [0], [0], [1], [0, 0, 1, 1], [], []>} : vector<16x16xf32>, vector<16x16xf32>, vector<16x16xf32> -> vector<16x16xf32>
    %15 = vector.extract_strided_slice %4 {offsets = [16, 0], sizes = [16, 16], strides = [1, 1]} : vector<64x16xf32> to vector<16x16xf32>
    %cst_15 = arith.constant dense<0.000000e+00> : vector<16x16xf32>
    %16 = tpu.matmul %6, %15, %cst_15 {dimension_numbers = #tpu.dot_dimension_numbers<[1], [0], [0], [1], [0, 0, 1, 1], [], []>} : vector<16x16xf32>, vector<16x16xf32>, vector<16x16xf32> -> vector<16x16xf32>
    %17 = arith.subf %14, %16 : vector<16x16xf32>
    %c16 = arith.constant 16 : index
    %c0_16 = arith.constant 0 : index
    %18 = vector.load %arg6[%c16, %c0_16] : memref<64x16xf32, #tpu.memory_space<vmem>>, vector<16x16xf32>
    tpu.vector_store %arg6[%c16, %c0_16], %17 {strides = array<i32>} : memref<64x16xf32, #tpu.memory_space<vmem>>, vector<16x16xf32>,
    %19 = vector.extract_strided_slice %3 {offsets = [32, 0], sizes = [16, 16], strides = [1, 1]} : vector<64x16xf32> to vector<16x16xf32>
    %cst_17 = arith.constant dense<0.000000e+00> : vector<16x16xf32>
    %20 = tpu.matmul %5, %19, %cst_17 {dimension_numbers = #tpu.dot_dimension_numbers<[1], [0], [0], [1], [0, 0, 1, 1], [], []>} : vector<16x16xf32>, vector<16x16xf32>, vector<16x16xf32> -> vector<16x16xf32>
    %21 = vector.extract_strided_slice %4 {offsets = [32, 0], sizes = [16, 16], strides = [1, 1]} : vector<64x16xf32> to vector<16x16xf32>
    %cst_18 = arith.constant dense<0.000000e+00> : vector<16x16xf32>
    %22 = tpu.matmul %6, %21, %cst_18 {dimension_numbers = #tpu.dot_dimension_numbers<[1], [0], [0], [1], [0, 0, 1, 1], [], []>} : vector<16x16xf32>, vector<16x16xf32>, vector<16x16xf32> -> vector<16x16xf32>
    %23 = arith.subf %20, %22 : vector<16x16xf32>
    %c32 = arith.constant 32 : index
    %c0_19 = arith.constant 0 : index
    %24 = vector.load %arg6[%c32, %c0_19] : memref<64x16xf32, #tpu.memory_space<vmem>>, vector<16x16xf32>
    tpu.vector_store %arg6[%c32, %c0_19], %23 {strides = array<i32>} : memref<64x16xf32, #tpu.memory_space<vmem>>, vector<16x16xf32>,
    %25 = vector.extract_strided_slice %3 {offsets = [48, 0], sizes = [16, 16], strides = [1, 1]} : vector<64x16xf32> to vector<16x16xf32>
    %cst_20 = arith.constant dense<0.000000e+00> : vector<16x16xf32>
    %26 = tpu.matmul %5, %25, %cst_20 {dimension_numbers = #tpu.dot_dimension_numbers<[1], [0], [0], [1], [0, 0, 1, 1], [], []>} : vector<16x16xf32>, vector<16x16xf32>, vector<16x16xf32> -> vector<16x16xf32>
    %27 = vector.extract_strided_slice %4 {offsets = [48, 0], sizes = [16, 16], strides = [1, 1]} : vector<64x16xf32> to vector<16x16xf32>
    %cst_21 = arith.constant dense<0.000000e+00> : vector<16x16xf32>
    %28 = tpu.matmul %6, %27, %cst_21 {dimension_numbers = #tpu.dot_dimension_numbers<[1], [0], [0], [1], [0, 0, 1, 1], [], []>} : vector<16x16xf32>, vector<16x16xf32>, vector<16x16xf32> -> vector<16x16xf32>
    %29 = arith.subf %26, %28 : vector<16x16xf32>
    %c48 = arith.constant 48 : index
    %c0_22 = arith.constant 0 : index
    %30 = vector.load %arg6[%c48, %c0_22] : memref<64x16xf32, #tpu.memory_space<vmem>>, vector<16x16xf32>
    tpu.vector_store %arg6[%c48, %c0_22], %29 {strides = array<i32>} : memref<64x16xf32, #tpu.memory_space<vmem>>, vector<16x16xf32>,
    return
  }
  func.func @transform_0(%arg0: i32) -> (i32, i32) {
    %c0_i32 = arith.constant 0 : i32
    %c0_i32_0 = arith.constant 0 : i32
    %c0_i32_1 = arith.constant 0 : i32
    return %c0_i32, %c0_i32_0 : i32, i32
  }
  func.func @transform_1(%arg0: i32) -> (i32, i32) {
    %c0_i32 = arith.constant 0 : i32
    %c0_i32_0 = arith.constant 0 : i32
    %c0_i32_1 = arith.constant 0 : i32
    return %c0_i32, %c0_i32_0 : i32, i32
  }
  func.func @transform_2(%arg0: i32) -> (i32, i32) {
    %c0_i32 = arith.constant 0 : i32
    %c0_i32_0 = arith.constant 0 : i32
    %c0_i32_1 = arith.constant 0 : i32
    return %c0_i32, %c0_i32_0 : i32, i32
  }
  func.func @transform_3(%arg0: i32) -> (i32, i32) {
    %c0_i32 = arith.constant 0 : i32
    %c0_i32_0 = arith.constant 0 : i32
    %c0_i32_1 = arith.constant 0 : i32
    return %c0_i32, %c0_i32_0 : i32, i32
  }
  func.func @transform_4(%arg0: i32) -> (i32, i32) {
    %c0_i32 = arith.constant 0 : i32
    %c0_i32_0 = arith.constant 0 : i32
    return %arg0, %c0_i32 : i32, i32
  }
  func.func @transform_5(%arg0: i32) -> (i32, i32) {
    %c0_i32 = arith.constant 0 : i32
    %c0_i32_0 = arith.constant 0 : i32
    return %arg0, %c0_i32 : i32, i32
  }
}

</mosaic_0001>

<llo_original>
// kernel: tpu_custom_call.1
$region0: #{tpu_custom_call.1}
  #allocation0 [shape = 'u32[]', space=smem, size = 0x4, offset = 0x4, fixed_abs, tag = 'smem constant byte address 0x4 - core index']
  #allocation1 [shape = 'u32[144,128]{1,0:T(1,128)}', space=vmem, size = 0x12000, scoped, tag = 'internal scratch']
  %s0 = inlined_call_operand.vmem [shape: f32[16,16], index: 0, kind: input, shape index: {}]
  %s1 = inlined_call_operand.vmem [shape: f32[16,16], index: 1, kind: input, shape index: {}]
  %s2 = inlined_call_operand.vmem [shape: f32[16,16], index: 2, kind: input, shape index: {}]
  %s3 = inlined_call_operand.vmem [shape: f32[16,16], index: 3, kind: input, shape index: {}]
  %s4 = inlined_call_operand.vmem [shape: f32[192,16], index: 4, kind: input, shape index: {}]
  %s5 = inlined_call_operand.vmem [shape: f32[192,16], index: 5, kind: output, shape index: {}]
  %s6 = sld [smem:[#allocation0]]
  $region53: #{tpu_custom_call.1} parent=0
    _
  %s8 = ssub.s32 1, %s6
  %s9 = scalar_select 0, %s8, %s6
  loop: start=0, step=1, limit=5
  $region2: #{tpu_custom_call.1} parent=0 // loop_pre_header
    _
  $region3: #{tpu_custom_call.1} parent=0 // loop_header
    %s11 = sphi 0, %s15
    %p12 = scmp.ge.s32.totalorder %s11, 5
    %s19 = sphi 0, %s19
    %s21 = sphi 0, %s19
    %s22 = sphi 0, %s21
    %s36 = sphi 0, %s22
    %s40 = sphi 0, %s40
    %s42 = sphi 0, %s40
    %s43 = sphi 0, %s42
    %s57 = sphi 0, %s43
    %s61 = sphi 0, %s61
    %s63 = sphi 0, %s61
    %s64 = sphi 0, %s63
    %s78 = sphi 0, %s64
    %s82 = sphi 0, %s82
    %s84 = sphi 0, %s82
    %s85 = sphi 0, %s84
    %s99 = sphi 0, %s85
    %s105 = sphi 0, %s107
    %s108 = sphi 0, %s105
    %s109 = sphi 0, %s108
    %s125 = sphi 0, %s109
    %s131 = sphi 0, %s133
    %s134 = sphi 0, %s131
    %s135 = sphi 0, %s134
    %s151 = sphi 0, %s135
  $region4: #{tpu_custom_call.1} parent=0 // loop_header_branch
    %14 = sbr.rel (%p12) target = $region8
  $region5: #{tpu_custom_call.1} parent=0 // loop_body
    %s16 = ssub.s32 %s11, 1
    %s17 = ssub.s32 %s11, 2
    %s18 = sadd.s32 %s11, 1
    %s20 = sadd.s32 %s19, 1
    %p23 = scmp.eq.s32.totalorder %s11, 2
    %p24 = scmp.ne.s32.totalorder %s19, %s21
    %p25 = scmp.eq.s32.totalorder %s11, 0
    %p26 = por %p24, %p25
    %p27 = scmp.ne.s32.totalorder %s19, %s21
    %p28 = scmp.eq.s32.totalorder %s16, 2
    %p29 = por %p27, %p28
    %p30 = scmp.ne.s32.totalorder %s21, %s22
    %p31 = scmp.eq.s32.totalorder %s16, 0
    %p32 = por %p30, %p31
    %p33 = scmp.ne.s32.totalorder %s21, %s22
    %p34 = scmp.eq.s32.totalorder %s17, 2
    %p35 = por %p33, %p34
    %p37 = scmp.ne.s32.totalorder %s22, %s36
    %p38 = scmp.eq.s32.totalorder %s17, 0
    %p39 = por %p37, %p38
    %s41 = sadd.s32 %s40, 1
    %p44 = scmp.eq.s32.totalorder %s11, 2
    %p45 = scmp.ne.s32.totalorder %s40, %s42
    %p46 = scmp.eq.s32.totalorder %s11, 0
    %p47 = por %p45, %p46
    %p48 = scmp.ne.s32.totalorder %s40, %s42
    %p49 = scmp.eq.s32.totalorder %s16, 2
    %p50 = por %p48, %p49
    %p51 = scmp.ne.s32.totalorder %s42, %s43
    %p52 = scmp.eq.s32.totalorder %s16, 0
    %p53 = por %p51, %p52
    %p54 = scmp.ne.s32.totalorder %s42, %s43
    %p55 = scmp.eq.s32.totalorder %s17, 2
    %p56 = por %p54, %p55
    %p58 = scmp.ne.s32.totalorder %s43, %s57
    %p59 = scmp.eq.s32.totalorder %s17, 0
    %p60 = por %p58, %p59
    %s62 = sadd.s32 %s61, 1
    %p65 = scmp.eq.s32.totalorder %s11, 2
    %p66 = scmp.ne.s32.totalorder %s61, %s63
    %p67 = scmp.eq.s32.totalorder %s11, 0
    %p68 = por %p66, %p67
    %p69 = scmp.ne.s32.totalorder %s61, %s63
    %p70 = scmp.eq.s32.totalorder %s16, 2
    %p71 = por %p69, %p70
    %p72 = scmp.ne.s32.totalorder %s63, %s64
    %p73 = scmp.eq.s32.totalorder %s16, 0
    %p74 = por %p72, %p73
    %p75 = scmp.ne.s32.totalorder %s63, %s64
    %p76 = scmp.eq.s32.totalorder %s17, 2
    %p77 = por %p75, %p76
    %p79 = scmp.ne.s32.totalorder %s64, %s78
    %p80 = scmp.eq.s32.totalorder %s17, 0
    %p81 = por %p79, %p80
    %s83 = sadd.s32 %s82, 1
    %p86 = scmp.eq.s32.totalorder %s11, 2
    %p87 = scmp.ne.s32.totalorder %s82, %s84
    %p88 = scmp.eq.s32.totalorder %s11, 0
    %p89 = por %p87, %p88
    %p90 = scmp.ne.s32.totalorder %s82, %s84
    %p91 = scmp.eq.s32.totalorder %s16, 2
    %p92 = por %p90, %p91
    %p93 = scmp.ne.s32.totalorder %s84, %s85
    %p94 = scmp.eq.s32.totalorder %s16, 0
    %p95 = por %p93, %p94
    %p96 = scmp.ne.s32.totalorder %s84, %s85
    %p97 = scmp.eq.s32.totalorder %s17, 2
    %p98 = por %p96, %p97
    %p100 = scmp.ne.s32.totalorder %s85, %s99
    %p101 = scmp.eq.s32.totalorder %s17, 0
    %p102 = por %p100, %p101
    %s103 = ssub.s32 %s11, %s18
    %p104 = scmp.eq.s32.totalorder %s103, 0
    %s106 = sadd.s32 %s105, 1
    %s107 = scalar_select %p104, %s105, %s106
    %p110 = pneg %p104
    %p111 = scmp.eq.s32.totalorder %s11, 2
    %p112 = por %p110, %p111
    %p113 = scmp.ne.s32.totalorder %s105, %s108
    %p114 = scmp.eq.s32.totalorder %s11, 0
    %p115 = por %p113, %p114
    %p116 = scmp.ne.s32.totalorder %s105, %s108
    %p117 = scmp.eq.s32.totalorder %s16, 2
    %p118 = por %p116, %p117
    %p119 = scmp.ne.s32.totalorder %s108, %s109
    %p120 = scmp.eq.s32.totalorder %s16, 0
    %p121 = por %p119, %p120
    %p122 = scmp.ne.s32.totalorder %s108, %s109
    %p123 = scmp.eq.s32.totalorder %s17, 2
    %p124 = por %p122, %p123
    %p126 = scmp.ne.s32.totalorder %s109, %s125
    %p127 = scmp.eq.s32.totalorder %s17, 0
    %p128 = por %p126, %p127
    %s129 = ssub.s32 %s11, %s18
    %p130 = scmp.eq.s32.totalorder %s129, 0
    %s132 = sadd.s32 %s131, 1
    %s133 = scalar_select %p130, %s131, %s132
    %p136 = pneg %p130
    %p137 = scmp.eq.s32.totalorder %s11, 2
    %p138 = por %p136, %p137
    %p139 = scmp.ne.s32.totalorder %s131, %s134
    %p140 = scmp.eq.s32.totalorder %s11, 0
    %p141 = por %p139, %p140
    %p142 = scmp.ne.s32.totalorder %s131, %s134
    %p143 = scmp.eq.s32.totalorder %s16, 2
    %p144 = por %p142, %p143
    %p145 = scmp.ne.s32.totalorder %s134, %s135
    %p146 = scmp.eq.s32.totalorder %s16, 0
    %p147 = por %p145, %p146
    %p148 = scmp.ne.s32.totalorder %s134, %s135
    %p149 = scmp.eq.s32.totalorder %s17, 2
    %p150 = por %p148, %p149
    %p152 = scmp.ne.s32.totalorder %s135, %s151
    %p153 = scmp.eq.s32.totalorder %s17, 0
    %p154 = por %p152, %p153
    %p155 = scmp.le.s32.totalorder 1, %s11
    %p156 = scmp.lt.s32.totalorder %s11, 4
    %p157 = pnand %p155, %p156
    %p158 = pneg %p157
    // Predicated region
    $region9: #{tpu_custom_call.1} parent=5 // pred_check
      _
    $region10: #{tpu_custom_call.1} parent=5 // pred_check_branch
      %160 = sbr.rel (%p157) target = $region12
    $region11: #{tpu_custom_call.1} parent=5 // pred_region
      %s161 = ssub.s32 %s11, 1
      // Predicated region
      $region13: #{tpu_custom_call.1} parent=11 // pred_check
        %p162 = pneg %p32
      $region14: #{tpu_custom_call.1} parent=11 // pred_check_branch
        %164 = sbr.rel (%p162) target = $region16
      $region15: #{tpu_custom_call.1} parent=11 // pred_region
        _
      $region16: #{tpu_custom_call.1} parent=11 // pred_fallthru
        _
      // Predicated region
      $region17: #{tpu_custom_call.1} parent=11 // pred_check
        %p165 = pneg %p53
      $region18: #{tpu_custom_call.1} parent=11 // pred_check_branch
        %167 = sbr.rel (%p165) target = $region20
      $region19: #{tpu_custom_call.1} parent=11 // pred_region
        _
      $region20: #{tpu_custom_call.1} parent=11 // pred_fallthru
        _
      // Predicated region
      $region21: #{tpu_custom_call.1} parent=11 // pred_check
        %p168 = pneg %p74
      $region22: #{tpu_custom_call.1} parent=11 // pred_check_branch
        %170 = sbr.rel (%p168) target = $region24
      $region23: #{tpu_custom_call.1} parent=11 // pred_region
        _
      $region24: #{tpu_custom_call.1} parent=11 // pred_fallthru
        _
      // Predicated region
      $region25: #{tpu_custom_call.1} parent=11 // pred_check
        %p171 = pneg %p95
      $region26: #{tpu_custom_call.1} parent=11 // pred_check_branch
        %173 = sbr.rel (%p171) target = $region28
      $region27: #{tpu_custom_call.1} parent=11 // pred_region
        _
      $region28: #{tpu_custom_call.1} parent=11 // pred_fallthru
        _
    $region12: #{tpu_custom_call.1} parent=5 // pred_fallthru
      _
    %p174 = scmp.lt.s32.totalorder %s11, 3
    // Predicated region
    $region29: #{tpu_custom_call.1} parent=5 // pred_check
      %p175 = pneg %p174
    $region30: #{tpu_custom_call.1} parent=5 // pred_check_branch
      %177 = sbr.rel (%p175) target = $region32
    $region31: #{tpu_custom_call.1} parent=5 // pred_region
      // Predicated region
      $region33: #{tpu_custom_call.1} parent=31 // pred_check
        %p178 = pneg %p115
      $region34: #{tpu_custom_call.1} parent=31 // pred_check_branch
        %180 = sbr.rel (%p178) target = $region36
      $region35: #{tpu_custom_call.1} parent=31 // pred_region
        %s181 = smul.u32 8, %s11
        %p182 = scmp.lt.s32.totalorder %s181, 23
        %s183 = scalar_select %p182, %s181, 23
        %s184 = smul.addr %s183, 8
        %s185 = scalar_lea.vmem %s4, %s184
        %s186 = smul.u32 8, %s11
      $region36: #{tpu_custom_call.1} parent=31 // pred_fallthru
        _
    $region32: #{tpu_custom_call.1} parent=5 // pred_fallthru
      _
    %p187 = scmp.le.s32.totalorder 1, %s11
    %p188 = scmp.lt.s32.totalorder %s11, 4
    %p189 = pnand %p187, %p188
    %p190 = pneg %p189
    // Predicated region
    $region37: #{tpu_custom_call.1} parent=5 // pred_check
      _
    $region38: #{tpu_custom_call.1} parent=5 // pred_check_branch
      %192 = sbr.rel (%p189) target = $region40
    $region39: #{tpu_custom_call.1} parent=5 // pred_region
      %s193 = ssub.s32 %s11, 1
      %p194 = pneg %p32
      %p195 = pneg %p29
      %p196 = pneg %p53
      %p197 = pneg %p50
      %p198 = pneg %p74
      %p199 = pneg %p71
      %p200 = pneg %p95
      %p201 = pneg %p92
      %s202 = smul.u32 8, %s16
      %p203 = scmp.lt.s32.totalorder %s202, 23
      %s204 = scalar_select %p203, %s202, 23
      %s205 = smul.addr %s204, 8
      %s206 = scalar_lea.vmem %s4, %s205
      %p207 = pneg %p121
      %p208 = pneg %p118
      %p209 = pneg %p147
      %p210 = pneg %p144
      %s211 = smul.u32 8, %s16
      %p212 = scmp.lt.s32.totalorder %s211, 23
      %s213 = scalar_select %p212, %s211, 23
      %s214 = smul.addr %s213, 8
      %s215 = scalar_lea.vmem %s5, %s214
      %s216 = smul.u32 8, %s16
      %p217 = scmp.lt.s32.totalorder %s216, 23
      %s218 = scalar_select %p217, %s216, 23
      %s219 = smul.addr %s218, 8
      %s220 = scalar_lea.vmem %s4, %s219
      %s221 = smul.u32 8, %s16
      %s222 = smul.u32 8, %s16
      %p223 = scmp.lt.s32.totalorder %s222, 23
      %s224 = scalar_select %p223, %s222, 23
      %s225 = smul.addr %s224, 8
      %s226 = scalar_lea.vmem %s5, %s225
      %s227 = smul.u32 8, %s16
      %v228 = vld [vmem:[%s220] sm:$0xff]
      %v229 = vld [vmem:[%s220 + $0x8] sm:$0xff]
      %v230 = vld [vmem:[%s220 + $0x10] sm:$0xff]
      %v231 = vld [vmem:[%s220 + $0x18] sm:$0xff]
      %v232 = vld [vmem:[%s220 + $0x20] sm:$0xff]
      %v233 = vld [vmem:[%s220 + $0x28] sm:$0xff]
      %v234 = vld [vmem:[%s220 + $0x30] sm:$0xff]
      %v235 = vld [vmem:[%s220 + $0x38] sm:$0xff]
      %v236 = vld [vmem:[%s0] sm:$0xff]
      %v237 = vld [vmem:[%s0 + $0x8] sm:$0xff]
      %v238 = vld [vmem:[%s1] sm:$0xff]
      %v239 = vld [vmem:[%s1 + $0x8] sm:$0xff]
      %vm240 = vcmask 130048
      %v242 = vsel %vm240, %v228, 0
      %v245 = vsel %vm240, %v229, 0
      %v248 = vsel %vm240, %v230, 0
      %v251 = vsel %vm240, %v231, 0
      %v254 = vsel %vm240, %v232, 0
      %v257 = vsel %vm240, %v233, 0
      %v260 = vsel %vm240, %v234, 0
      %v263 = vsel %vm240, %v235, 0
      %265 = vmatprep.subr.mxu0 0.0
      %266 = vmatpush1.msra.mxu0 %v236
      %267 = vmatprep.subr.mxu0 0.0
      %268 = vmatpush1.msra.mxu0 %v237
      %269 = vmatprep.subr.mxu0 0.0
      %270 = vmatpush1.msra.mxu0 0.0
      %271 = vmatprep.subr.mxu0 0.0
      %272 = vmatpush1.msra.mxu0 0.0
      %273 = vmatprep.subr.mxu0 0.0
      %274 = vmatpush1.msra.mxu0 0.0
      %275 = vmatprep.subr.mxu0 0.0
      %276 = vmatpush1.msra.mxu0 0.0
      %277 = vmatprep.subr.mxu0 0.0
      %278 = vmatpush1.msra.mxu0 0.0
      %279 = vmatprep.subr.mxu0 0.0
      %280 = vmatpush1.msra.mxu0 0.0
      %281 = vmatprep.subr.mxu0 0.0
      %282 = vmatpush1.msra.mxu0 0.0
      %283 = vmatprep.subr.mxu0 0.0
      %284 = vmatpush1.msra.mxu0 0.0
      %285 = vmatprep.subr.mxu0 0.0
      %286 = vmatpush1.msra.mxu0 0.0
      %287 = vmatprep.subr.mxu0 0.0
      %288 = vmatpush1.msra.mxu0 0.0
      %289 = vmatprep.subr.mxu0 0.0
      %290 = vmatpush1.msra.mxu0 0.0
      %291 = vmatprep.subr.mxu0 0.0
      %292 = vmatpush1.msra.mxu0 0.0
      %293 = vmatprep.subr.mxu0 0.0
      %294 = vmatpush1.msra.mxu0 0.0
      %295 = vmatprep.subr.mxu0 0.0
      %296 = vmatpush1.msra.mxu0 0.0
      %297 = vmatprep.subr.mxu0 0.0
      %298 = vmatpush1.msra.mxu0 0.0
      %299 = vmatprep.subr.mxu0 0.0
      %300 = vmatpush1.msra.mxu0 0.0
      %301 = vmatprep.subr.mxu0 0.0
      %302 = vmatpush1.msra.mxu0 0.0
      %303 = vmatprep.subr.mxu0 0.0
      %304 = vmatpush1.msra.mxu0 0.0
      %305 = vmatprep.subr.mxu0 0.0
      %306 = vmatpush1.msra.mxu0 0.0
      %307 = vmatprep.subr.mxu0 0.0
      %308 = vmatpush1.msra.mxu0 0.0
      %309 = vmatprep.subr.mxu0 0.0
      %310 = vmatpush1.msra.mxu0 0.0
      %311 = vmatprep.subr.mxu0 0.0
      %312 = vmatpush1.msra.mxu0 0.0
      %313 = vmatprep.subr.mxu0 0.0
      %314 = vmatpush1.msra.mxu0 0.0
      %315 = vmatprep.subr.mxu0 0.0
      %316 = vmatpush1.msra.mxu0 0.0
      %317 = vmatprep.subr.mxu0 0.0
      %318 = vmatpush1.msra.mxu0 0.0
      %319 = vmatprep.subr.mxu0 0.0
      %320 = vmatpush1.msra.mxu0 0.0
      %321 = vmatprep.subr.mxu0 0.0
      %322 = vmatpush1.msra.mxu0 0.0
      %323 = vmatprep.subr.mxu0 0.0
      %324 = vmatpush1.msra.mxu0 0.0
      %325 = vmatprep.subr.mxu0 0.0
      %326 = vmatpush1.msra.mxu0 0.0
      %327 = vmatprep.subr.mxu0 0.0
      %328 = vmatpush1.msra.mxu0 0.0
      %329 = vmatprep.mubr.f32.mxu0 0.0
      %330 = vmatmul.mubr.f32.gmra.mrb[0].mxu0 %v242
      %v331 = vpop.f32.mrb[0].mxu0
      %v332 = vadd.f32 0.0, %v331
      %v333 = vpop.f32.mrb[0].mxu0
      %334 = vmatprep.mubr.f32.mxu0 0.0
      %335 = vmatmul.mubr.f32.gmra.mrb[0].mxu0 %v245
      %v336 = vpop.f32.mrb[0].mxu0
      %v337 = vadd.f32 0.0, %v336
      %v338 = vpop.f32.mrb[0].mxu0
      %339 = vmatprep.mubr.f32.mxu0 0.0
      %340 = vmatmul.mubr.f32.gmra.mrb[0].mxu0 %v248
      %v341 = vpop.f32.mrb[0].mxu0
      %v342 = vadd.f32 0.0, %v341
      %v343 = vpop.f32.mrb[0].mxu0
      %344 = vmatprep.mubr.f32.mxu0 0.0
      %345 = vmatmul.mubr.f32.gmra.mrb[0].mxu0 %v251
      %v346 = vpop.f32.mrb[0].mxu0
      %v347 = vadd.f32 0.0, %v346
      %v348 = vpop.f32.mrb[0].mxu0
      %349 = vmatprep.mubr.f32.mxu0 0.0
      %350 = vmatmul.mubr.f32.gmra.mrb[0].mxu0 %v254
      %v351 = vpop.f32.mrb[0].mxu0
      %v352 = vadd.f32 0.0, %v351
      %v353 = vpop.f32.mrb[0].mxu0
      %354 = vmatprep.mubr.f32.mxu0 0.0
      %355 = vmatmul.mubr.f32.gmra.mrb[0].mxu0 %v257
      %v356 = vpop.f32.mrb[0].mxu0
      %v357 = vadd.f32 0.0, %v356
      %v358 = vpop.f32.mrb[0].mxu0
      %359 = vmatprep.mubr.f32.mxu0 0.0
      %360 = vmatmul.mubr.f32.gmra.mrb[0].mxu0 %v260
      %v361 = vpop.f32.mrb[0].mxu0
      %v362 = vadd.f32 0.0, %v361
      %v363 = vpop.f32.mrb[0].mxu0
      %364 = vmatprep.mubr.f32.mxu0 0.0
      %365 = vmatmul.mubr.f32.gmra.mrb[0].mxu0 %v263
      %v366 = vpop.f32.mrb[0].mxu0
      %v367 = vadd.f32 0.0, %v366
      %v368 = vpop.f32.mrb[0].mxu0
      %369 = vdwg.mxu0
      %370 = vmatprep.subr.mxu0 0.0
      %371 = vmatpush1.msra.mxu0 %v238
      %372 = vmatprep.subr.mxu0 0.0
      %373 = vmatpush1.msra.mxu0 %v239
      %374 = vmatprep.subr.mxu0 0.0
      %375 = vmatpush1.msra.mxu0 0.0
      %376 = vmatprep.subr.mxu0 0.0
      %377 = vmatpush1.msra.mxu0 0.0
      %378 = vmatprep.subr.mxu0 0.0
      %379 = vmatpush1.msra.mxu0 0.0
      %380 = vmatprep.subr.mxu0 0.0
      %381 = vmatpush1.msra.mxu0 0.0
      %382 = vmatprep.subr.mxu0 0.0
      %383 = vmatpush1.msra.mxu0 0.0
      %384 = vmatprep.subr.mxu0 0.0
      %385 = vmatpush1.msra.mxu0 0.0
      %386 = vmatprep.subr.mxu0 0.0
      %387 = vmatpush1.msra.mxu0 0.0
      %388 = vmatprep.subr.mxu0 0.0
      %389 = vmatpush1.msra.mxu0 0.0
      %390 = vmatprep.subr.mxu0 0.0
      %391 = vmatpush1.msra.mxu0 0.0
      %392 = vmatprep.subr.mxu0 0.0
      %393 = vmatpush1.msra.mxu0 0.0
      %394 = vmatprep.subr.mxu0 0.0
      %395 = vmatpush1.msra.mxu0 0.0
      %396 = vmatprep.subr.mxu0 0.0
      %397 = vmatpush1.msra.mxu0 0.0
      %398 = vmatprep.subr.mxu0 0.0
      %399 = vmatpush1.msra.mxu0 0.0
      %400 = vmatprep.subr.mxu0 0.0
      %401 = vmatpush1.msra.mxu0 0.0
      %402 = vmatprep.subr.mxu0 0.0
      %403 = vmatpush1.msra.mxu0 0.0
      %404 = vmatprep.subr.mxu0 0.0
      %405 = vmatpush1.msra.mxu0 0.0
      %406 = vmatprep.subr.mxu0 0.0
      %407 = vmatpush1.msra.mxu0 0.0
      %408 = vmatprep.subr.mxu0 0.0
      %409 = vmatpush1.msra.mxu0 0.0
      %410 = vmatprep.subr.mxu0 0.0
      %411 = vmatpush1.msra.mxu0 0.0
      %412 = vmatprep.subr.mxu0 0.0
      %413 = vmatpush1.msra.mxu0 0.0
      %414 = vmatprep.subr.mxu0 0.0
      %415 = vmatpush1.msra.mxu0 0.0
      %416 = vmatprep.subr.mxu0 0.0
      %417 = vmatpush1.msra.mxu0 0.0
      %418 = vmatprep.subr.mxu0 0.0
      %419 = vmatpush1.msra.mxu0 0.0
      %420 = vmatprep.subr.mxu0 0.0
      %421 = vmatpush1.msra.mxu0 0.0
      %422 = vmatprep.subr.mxu0 0.0
      %423 = vmatpush1.msra.mxu0 0.0
      %424 = vmatprep.subr.mxu0 0.0
      %425 = vmatpush1.msra.mxu0 0.0
      %426 = vmatprep.subr.mxu0 0.0
      %427 = vmatpush1.msra.mxu0 0.0
      %428 = vmatprep.subr.mxu0 0.0
      %429 = vmatpush1.msra.mxu0 0.0
      %430 = vmatprep.subr.mxu0 0.0
      %431 = vmatpush1.msra.mxu0 0.0
      %432 = vmatprep.subr.mxu0 0.0
      %433 = vmatpush1.msra.mxu0 0.0
      %434 = vmatprep.mubr.f32.mxu0 0.0
      %435 = vmatmul.mubr.f32.gmra.mrb[0].mxu0 %v242
      %v436 = vpop.f32.mrb[0].mxu0
      %v437 = vadd.f32 0.0, %v436
      %v438 = vpop.f32.mrb[0].mxu0
      %439 = vmatprep.mubr.f32.mxu0 0.0
      %440 = vmatmul.mubr.f32.gmra.mrb[0].mxu0 %v245
      %v441 = vpop.f32.mrb[0].mxu0
      %v442 = vadd.f32 0.0, %v441
      %v443 = vpop.f32.mrb[0].mxu0
      %444 = vmatprep.mubr.f32.mxu0 0.0
      %445 = vmatmul.mubr.f32.gmra.mrb[0].mxu0 %v248
      %v446 = vpop.f32.mrb[0].mxu0
      %v447 = vadd.f32 0.0, %v446
      %v448 = vpop.f32.mrb[0].mxu0
      %449 = vmatprep.mubr.f32.mxu0 0.0
      %450 = vmatmul.mubr.f32.gmra.mrb[0].mxu0 %v251
      %v451 = vpop.f32.mrb[0].mxu0
      %v452 = vadd.f32 0.0, %v451
      %v453 = vpop.f32.mrb[0].mxu0
      %454 = vmatprep.mubr.f32.mxu0 0.0
      %455 = vmatmul.mubr.f32.gmra.mrb[0].mxu0 %v254
      %v456 = vpop.f32.mrb[0].mxu0
      %v457 = vadd.f32 0.0, %v456
      %v458 = vpop.f32.mrb[0].mxu0
      %459 = vmatprep.mubr.f32.mxu0 0.0
      %460 = vmatmul.mubr.f32.gmra.mrb[0].mxu0 %v257
      %v461 = vpop.f32.mrb[0].mxu0
      %v462 = vadd.f32 0.0, %v461
      %v463 = vpop.f32.mrb[0].mxu0
      %464 = vmatprep.mubr.f32.mxu0 0.0
      %465 = vmatmul.mubr.f32.gmra.mrb[0].mxu0 %v260
      %v466 = vpop.f32.mrb[0].mxu0
      %v467 = vadd.f32 0.0, %v466
      %v468 = vpop.f32.mrb[0].mxu0
      %469 = vmatprep.mubr.f32.mxu0 0.0
      %470 = vmatmul.mubr.f32.gmra.mrb[0].mxu0 %v263
      %v471 = vpop.f32.mrb[0].mxu0
      %v472 = vadd.f32 0.0, %v471
      %v473 = vpop.f32.mrb[0].mxu0
      %474 = vdwg.mxu0
      %v475 = vld [vmem:[%s2] sm:$0xff]
      %v476 = vld [vmem:[%s2 + $0x8] sm:$0xff]
      %v477 = vld [vmem:[%s3] sm:$0xff]
      %v478 = vld [vmem:[%s3 + $0x8] sm:$0xff]
      %v480 = vsel %vm240, %v475, 0
      %v483 = vsel %vm240, %v476, 0
      %485 = vmatprep.subr.mxu0 0.0
      %486 = vmatpush1.msra.mxu0 %v332
      %487 = vmatprep.subr.mxu0 0.0
      %488 = vmatpush1.msra.mxu0 %v337
      %489 = vmatprep.subr.mxu0 0.0
      %490 = vmatpush1.msra.mxu0 0.0
      %491 = vmatprep.subr.mxu0 0.0
      %492 = vmatpush1.msra.mxu0 0.0
      %493 = vmatprep.subr.mxu0 0.0
      %494 = vmatpush1.msra.mxu0 0.0
      %495 = vmatprep.subr.mxu0 0.0
      %496 = vmatpush1.msra.mxu0 0.0
      %497 = vmatprep.subr.mxu0 0.0
      %498 = vmatpush1.msra.mxu0 0.0
      %499 = vmatprep.subr.mxu0 0.0
      %500 = vmatpush1.msra.mxu0 0.0
      %501 = vmatprep.subr.mxu0 0.0
      %502 = vmatpush1.msra.mxu0 0.0
      %503 = vmatprep.subr.mxu0 0.0
      %504 = vmatpush1.msra.mxu0 0.0
      %505 = vmatprep.subr.mxu0 0.0
      %506 = vmatpush1.msra.mxu0 0.0
      %507 = vmatprep.subr.mxu0 0.0
      %508 = vmatpush1.msra.mxu0 0.0
      %509 = vmatprep.subr.mxu0 0.0
      %510 = vmatpush1.msra.mxu0 0.0
      %511 = vmatprep.subr.mxu0 0.0
      %512 = vmatpush1.msra.mxu0 0.0
      %513 = vmatprep.subr.mxu0 0.0
      %514 = vmatpush1.msra.mxu0 0.0
      %515 = vmatprep.subr.mxu0 0.0
      %516 = vmatpush1.msra.mxu0 0.0
      %517 = vmatprep.subr.mxu0 0.0
      %518 = vmatpush1.msra.mxu0 0.0
      %519 = vmatprep.subr.mxu0 0.0
      %520 = vmatpush1.msra.mxu0 0.0
      %521 = vmatprep.subr.mxu0 0.0
      %522 = vmatpush1.msra.mxu0 0.0
      %523 = vmatprep.subr.mxu0 0.0
      %524 = vmatpush1.msra.mxu0 0.0
      %525 = vmatprep.subr.mxu0 0.0
      %526 = vmatpush1.msra.mxu0 0.0
      %527 = vmatprep.subr.mxu0 0.0
      %528 = vmatpush1.msra.mxu0 0.0
      %529 = vmatprep.subr.mxu0 0.0
      %530 = vmatpush1.msra.mxu0 0.0
      %531 = vmatprep.subr.mxu0 0.0
      %532 = vmatpush1.msra.mxu0 0.0
      %533 = vmatprep.subr.mxu0 0.0
      %534 = vmatpush1.msra.mxu0 0.0
      %535 = vmatprep.subr.mxu0 0.0
      %536 = vmatpush1.msra.mxu0 0.0
      %537 = vmatprep.subr.mxu0 0.0
      %538 = vmatpush1.msra.mxu0 0.0
      %539 = vmatprep.subr.mxu0 0.0
      %540 = vmatpush1.msra.mxu0 0.0
      %541 = vmatprep.subr.mxu0 0.0
      %542 = vmatpush1.msra.mxu0 0.0
      %543 = vmatprep.subr.mxu0 0.0
      %544 = vmatpush1.msra.mxu0 0.0
      %545 = vmatprep.subr.mxu0 0.0
      %546 = vmatpush1.msra.mxu0 0.0
      %547 = vmatprep.subr.mxu0 0.0
      %548 = vmatpush1.msra.mxu0 0.0
      %549 = vmatprep.mubr.f32.mxu0 0.0
      %550 = vmatmul.mubr.f32.gmra.mrb[0].mxu0 %v480
      %v551 = vpop.f32.mrb[0].mxu0
      %v552 = vadd.f32 0.0, %v551
      %v553 = vpop.f32.mrb[0].mxu0
      %554 = vmatprep.mubr.f32.mxu0 0.0
      %555 = vmatmul.mubr.f32.gmra.mrb[0].mxu0 %v483
      %v556 = vpop.f32.mrb[0].mxu0
      %v557 = vadd.f32 0.0, %v556
      %v558 = vpop.f32.mrb[0].mxu0
      %559 = vdwg.mxu0
      %v561 = vsel %vm240, %v477, 0
      %v564 = vsel %vm240, %v478, 0
      %566 = vmatprep.subr.mxu0 0.0
      %567 = vmatpush1.msra.mxu0 %v437
      %568 = vmatprep.subr.mxu0 0.0
      %569 = vmatpush1.msra.mxu0 %v442
      %570 = vmatprep.subr.mxu0 0.0
      %571 = vmatpush1.msra.mxu0 0.0
      %572 = vmatprep.subr.mxu0 0.0
      %573 = vmatpush1.msra.mxu0 0.0
      %574 = vmatprep.subr.mxu0 0.0
      %575 = vmatpush1.msra.mxu0 0.0
      %576 = vmatprep.subr.mxu0 0.0
      %577 = vmatpush1.msra.mxu0 0.0
      %578 = vmatprep.subr.mxu0 0.0
      %579 = vmatpush1.msra.mxu0 0.0
      %580 = vmatprep.subr.mxu0 0.0
      %581 = vmatpush1.msra.mxu0 0.0
      %582 = vmatprep.subr.mxu0 0.0
      %583 = vmatpush1.msra.mxu0 0.0
      %584 = vmatprep.subr.mxu0 0.0
      %585 = vmatpush1.msra.mxu0 0.0
      %586 = vmatprep.subr.mxu0 0.0
      %587 = vmatpush1.msra.mxu0 0.0
      %588 = vmatprep.subr.mxu0 0.0
      %589 = vmatpush1.msra.mxu0 0.0
      %590 = vmatprep.subr.mxu0 0.0
      %591 = vmatpush1.msra.mxu0 0.0
      %592 = vmatprep.subr.mxu0 0.0
      %593 = vmatpush1.msra.mxu0 0.0
      %594 = vmatprep.subr.mxu0 0.0
      %595 = vmatpush1.msra.mxu0 0.0
      %596 = vmatprep.subr.mxu0 0.0
      %597 = vmatpush1.msra.mxu0 0.0
      %598 = vmatprep.subr.mxu0 0.0
      %599 = vmatpush1.msra.mxu0 0.0
      %600 = vmatprep.subr.mxu0 0.0
      %601 = vmatpush1.msra.mxu0 0.0
      %602 = vmatprep.subr.mxu0 0.0
      %603 = vmatpush1.msra.mxu0 0.0
      %604 = vmatprep.subr.mxu0 0.0
      %605 = vmatpush1.msra.mxu0 0.0
      %606 = vmatprep.subr.mxu0 0.0
      %607 = vmatpush1.msra.mxu0 0.0
      %608 = vmatprep.subr.mxu0 0.0
      %609 = vmatpush1.msra.mxu0 0.0
      %610 = vmatprep.subr.mxu0 0.0
      %611 = vmatpush1.msra.mxu0 0.0
      %612 = vmatprep.subr.mxu0 0.0
      %613 = vmatpush1.msra.mxu0 0.0
      %614 = vmatprep.subr.mxu0 0.0
      %615 = vmatpush1.msra.mxu0 0.0
      %616 = vmatprep.subr.mxu0 0.0
      %617 = vmatpush1.msra.mxu0 0.0
      %618 = vmatprep.subr.mxu0 0.0
      %619 = vmatpush1.msra.mxu0 0.0
      %620 = vmatprep.subr.mxu0 0.0
      %621 = vmatpush1.msra.mxu0 0.0
      %622 = vmatprep.subr.mxu0 0.0
      %623 = vmatpush1.msra.mxu0 0.0
      %624 = vmatprep.subr.mxu0 0.0
      %625 = vmatpush1.msra.mxu0 0.0
      %626 = vmatprep.subr.mxu0 0.0
      %627 = vmatpush1.msra.mxu0 0.0
      %628 = vmatprep.subr.mxu0 0.0
      %629 = vmatpush1.msra.mxu0 0.0
      %630 = vmatprep.mubr.f32.mxu0 0.0
      %631 = vmatmul.mubr.f32.gmra.mrb[0].mxu0 %v561
      %v632 = vpop.f32.mrb[0].mxu0
      %v633 = vadd.f32 0.0, %v632
      %v634 = vpop.f32.mrb[0].mxu0
      %635 = vmatprep.mubr.f32.mxu0 0.0
      %636 = vmatmul.mubr.f32.gmra.mrb[0].mxu0 %v564
      %v637 = vpop.f32.mrb[0].mxu0
      %v638 = vadd.f32 0.0, %v637
      %v639 = vpop.f32.mrb[0].mxu0
      %640 = vdwg.mxu0
      %v641 = vsub.f32 %v552, %v633
      %v642 = vsub.f32 %v557, %v638
      %643 = vst.msk [vmem:[%s226] sm:$0xff] %vm240, %v641
      %644 = vst.msk [vmem:[%s226 + $0x8] sm:$0xff] %vm240, %v642
      %645 = vmatprep.subr.mxu0 0.0
      %646 = vmatpush1.msra.mxu0 %v342
      %647 = vmatprep.subr.mxu0 0.0
      %648 = vmatpush1.msra.mxu0 %v347
      %649 = vmatprep.subr.mxu0 0.0
      %650 = vmatpush1.msra.mxu0 0.0
      %651 = vmatprep.subr.mxu0 0.0
      %652 = vmatpush1.msra.mxu0 0.0
      %653 = vmatprep.subr.mxu0 0.0
      %654 = vmatpush1.msra.mxu0 0.0
      %655 = vmatprep.subr.mxu0 0.0
      %656 = vmatpush1.msra.mxu0 0.0
      %657 = vmatprep.subr.mxu0 0.0
      %658 = vmatpush1.msra.mxu0 0.0
      %659 = vmatprep.subr.mxu0 0.0
      %660 = vmatpush1.msra.mxu0 0.0
      %661 = vmatprep.subr.mxu0 0.0
      %662 = vmatpush1.msra.mxu0 0.0
      %663 = vmatprep.subr.mxu0 0.0
      %664 = vmatpush1.msra.mxu0 0.0
      %665 = vmatprep.subr.mxu0 0.0
      %666 = vmatpush1.msra.mxu0 0.0
      %667 = vmatprep.subr.mxu0 0.0
      %668 = vmatpush1.msra.mxu0 0.0
      %669 = vmatprep.subr.mxu0 0.0
      %670 = vmatpush1.msra.mxu0 0.0
      %671 = vmatprep.subr.mxu0 0.0
      %672 = vmatpush1.msra.mxu0 0.0
      %673 = vmatprep.subr.mxu0 0.0
      %674 = vmatpush1.msra.mxu0 0.0
      %675 = vmatprep.subr.mxu0 0.0
      %676 = vmatpush1.msra.mxu0 0.0
      %677 = vmatprep.subr.mxu0 0.0
      %678 = vmatpush1.msra.mxu0 0.0
      %679 = vmatprep.subr.mxu0 0.0
      %680 = vmatpush1.msra.mxu0 0.0
      %681 = vmatprep.subr.mxu0 0.0
      %682 = vmatpush1.msra.mxu0 0.0
      %683 = vmatprep.subr.mxu0 0.0
      %684 = vmatpush1.msra.mxu0 0.0
      %685 = vmatprep.subr.mxu0 0.0
      %686 = vmatpush1.msra.mxu0 0.0
      %687 = vmatprep.subr.mxu0 0.0
      %688 = vmatpush1.msra.mxu0 0.0
      %689 = vmatprep.subr.mxu0 0.0
      %690 = vmatpush1.msra.mxu0 0.0
      %691 = vmatprep.subr.mxu0 0.0
      %692 = vmatpush1.msra.mxu0 0.0
      %693 = vmatprep.subr.mxu0 0.0
      %694 = vmatpush1.msra.mxu0 0.0
      %695 = vmatprep.subr.mxu0 0.0
      %696 = vmatpush1.msra.mxu0 0.0
      %697 = vmatprep.subr.mxu0 0.0
      %698 = vmatpush1.msra.mxu0 0.0
      %699 = vmatprep.subr.mxu0 0.0
      %700 = vmatpush1.msra.mxu0 0.0
      %701 = vmatprep.subr.mxu0 0.0
      %702 = vmatpush1.msra.mxu0 0.0
      %703 = vmatprep.subr.mxu0 0.0
      %704 = vmatpush1.msra.mxu0 0.0
      %705 = vmatprep.subr.mxu0 0.0
      %706 = vmatpush1.msra.mxu0 0.0
      %707 = vmatprep.subr.mxu0 0.0
      %708 = vmatpush1.msra.mxu0 0.0
      %709 = vmatprep.mubr.f32.mxu0 0.0
      %710 = vmatmul.mubr.f32.gmra.mrb[0].mxu0 %v480
      %v711 = vpop.f32.mrb[0].mxu0
      %v712 = vadd.f32 0.0, %v711
      %v713 = vpop.f32.mrb[0].mxu0
      %714 = vmatprep.mubr.f32.mxu0 0.0
      %715 = vmatmul.mubr.f32.gmra.mrb[0].mxu0 %v483
      %v716 = vpop.f32.mrb[0].mxu0
      %v717 = vadd.f32 0.0, %v716
      %v718 = vpop.f32.mrb[0].mxu0
      %719 = vdwg.mxu0
      %720 = vmatprep.subr.mxu0 0.0
      %721 = vmatpush1.msra.mxu0 %v447
      %722 = vmatprep.subr.mxu0 0.0
      %723 = vmatpush1.msra.mxu0 %v452
      %724 = vmatprep.subr.mxu0 0.0
      %725 = vmatpush1.msra.mxu0 0.0
      %726 = vmatprep.subr.mxu0 0.0
      %727 = vmatpush1.msra.mxu0 0.0
      %728 = vmatprep.subr.mxu0 0.0
      %729 = vmatpush1.msra.mxu0 0.0
      %730 = vmatprep.subr.mxu0 0.0
      %731 = vmatpush1.msra.mxu0 0.0
      %732 = vmatprep.subr.mxu0 0.0
      %733 = vmatpush1.msra.mxu0 0.0
      %734 = vmatprep.subr.mxu0 0.0
      %735 = vmatpush1.msra.mxu0 0.0
      %736 = vmatprep.subr.mxu0 0.0
      %737 = vmatpush1.msra.mxu0 0.0
      %738 = vmatprep.subr.mxu0 0.0
      %739 = vmatpush1.msra.mxu0 0.0
      %740 = vmatprep.subr.mxu0 0.0
      %741 = vmatpush1.msra.mxu0 0.0
      %742 = vmatprep.subr.mxu0 0.0
      %743 = vmatpush1.msra.mxu0 0.0
      %744 = vmatprep.subr.mxu0 0.0
      %745 = vmatpush1.msra.mxu0 0.0
      %746 = vmatprep.subr.mxu0 0.0
      %747 = vmatpush1.msra.mxu0 0.0
      %748 = vmatprep.subr.mxu0 0.0
      %749 = vmatpush1.msra.mxu0 0.0
      %750 = vmatprep.subr.mxu0 0.0
      %751 = vmatpush1.msra.mxu0 0.0
      %752 = vmatprep.subr.mxu0 0.0
      %753 = vmatpush1.msra.mxu0 0.0
      %754 = vmatprep.subr.mxu0 0.0
      %755 = vmatpush1.msra.mxu0 0.0
      %756 = vmatprep.subr.mxu0 0.0
      %757 = vmatpush1.msra.mxu0 0.0
      %758 = vmatprep.subr.mxu0 0.0
      %759 = vmatpush1.msra.mxu0 0.0
      %760 = vmatprep.subr.mxu0 0.0
      %761 = vmatpush1.msra.mxu0 0.0
      %762 = vmatprep.subr.mxu0 0.0
      %763 = vmatpush1.msra.mxu0 0.0
      %764 = vmatprep.subr.mxu0 0.0
      %765 = vmatpush1.msra.mxu0 0.0
      %766 = vmatprep.subr.mxu0 0.0
      %767 = vmatpush1.msra.mxu0 0.0
      %768 = vmatprep.subr.mxu0 0.0
      %769 = vmatpush1.msra.mxu0 0.0
      %770 = vmatprep.subr.mxu0 0.0
      %771 = vmatpush1.msra.mxu0 0.0
      %772 = vmatprep.subr.mxu0 0.0
      %773 = vmatpush1.msra.mxu0 0.0
      %774 = vmatprep.subr.mxu0 0.0
      %775 = vmatpush1.msra.mxu0 0.0
      %776 = vmatprep.subr.mxu0 0.0
      %777 = vmatpush1.msra.mxu0 0.0
      %778 = vmatprep.subr.mxu0 0.0
      %779 = vmatpush1.msra.mxu0 0.0
      %780 = vmatprep.subr.mxu0 0.0
      %781 = vmatpush1.msra.mxu0 0.0
      %782 = vmatprep.subr.mxu0 0.0
      %783 = vmatpush1.msra.mxu0 0.0
      %784 = vmatprep.mubr.f32.mxu0 0.0
      %785 = vmatmul.mubr.f32.gmra.mrb[0].mxu0 %v561
      %v786 = vpop.f32.mrb[0].mxu0
      %v787 = vadd.f32 0.0, %v786
      %v788 = vpop.f32.mrb[0].mxu0
      %789 = vmatprep.mubr.f32.mxu0 0.0
      %790 = vmatmul.mubr.f32.gmra.mrb[0].mxu0 %v564
      %v791 = vpop.f32.mrb[0].mxu0
      %v792 = vadd.f32 0.0, %v791
      %v793 = vpop.f32.mrb[0].mxu0
      %794 = vdwg.mxu0
      %v795 = vsub.f32 %v712, %v787
      %v796 = vsub.f32 %v717, %v792
      %797 = vst.msk [vmem:[%s226 + $0x10] sm:$0xff] %vm240, %v795
      %798 = vst.msk [vmem:[%s226 + $0x18] sm:$0xff] %vm240, %v796
      %799 = vmatprep.subr.mxu0 0.0
      %800 = vmatpush1.msra.mxu0 %v352
      %801 = vmatprep.subr.mxu0 0.0
      %802 = vmatpush1.msra.mxu0 %v357
      %803 = vmatprep.subr.mxu0 0.0
      %804 = vmatpush1.msra.mxu0 0.0
      %805 = vmatprep.subr.mxu0 0.0
      %806 = vmatpush1.msra.mxu0 0.0
      %807 = vmatprep.subr.mxu0 0.0
      %808 = vmatpush1.msra.mxu0 0.0
      %809 = vmatprep.subr.mxu0 0.0
      %810 = vmatpush1.msra.mxu0 0.0
      %811 = vmatprep.subr.mxu0 0.0
      %812 = vmatpush1.msra.mxu0 0.0
      %813 = vmatprep.subr.mxu0 0.0
      %814 = vmatpush1.msra.mxu0 0.0
      %815 = vmatprep.subr.mxu0 0.0
      %816 = vmatpush1.msra.mxu0 0.0
      %817 = vmatprep.subr.mxu0 0.0
      %818 = vmatpush1.msra.mxu0 0.0
      %819 = vmatprep.subr.mxu0 0.0
      %820 = vmatpush1.msra.mxu0 0.0
      %821 = vmatprep.subr.mxu0 0.0
      %822 = vmatpush1.msra.mxu0 0.0
      %823 = vmatprep.subr.mxu0 0.0
      %824 = vmatpush1.msra.mxu0 0.0
      %825 = vmatprep.subr.mxu0 0.0
      %826 = vmatpush1.msra.mxu0 0.0
      %827 = vmatprep.subr.mxu0 0.0
      %828 = vmatpush1.msra.mxu0 0.0
      %829 = vmatprep.subr.mxu0 0.0
      %830 = vmatpush1.msra.mxu0 0.0
      %831 = vmatprep.subr.mxu0 0.0
      %832 = vmatpush1.msra.mxu0 0.0
      %833 = vmatprep.subr.mxu0 0.0
      %834 = vmatpush1.msra.mxu0 0.0
      %835 = vmatprep.subr.mxu0 0.0
      %836 = vmatpush1.msra.mxu0 0.0
      %837 = vmatprep.subr.mxu0 0.0
      %838 = vmatpush1.msra.mxu0 0.0
      %839 = vmatprep.subr.mxu0 0.0
      %840 = vmatpush1.msra.mxu0 0.0
      %841 = vmatprep.subr.mxu0 0.0
      %842 = vmatpush1.msra.mxu0 0.0
      %843 = vmatprep.subr.mxu0 0.0
      %844 = vmatpush1.msra.mxu0 0.0
      %845 = vmatprep.subr.mxu0 0.0
      %846 = vmatpush1.msra.mxu0 0.0
      %847 = vmatprep.subr.mxu0 0.0
      %848 = vmatpush1.msra.mxu0 0.0
      %849 = vmatprep.subr.mxu0 0.0
      %850 = vmatpush1.msra.mxu0 0.0
      %851 = vmatprep.subr.mxu0 0.0
      %852 = vmatpush1.msra.mxu0 0.0
      %853 = vmatprep.subr.mxu0 0.0
      %854 = vmatpush1.msra.mxu0 0.0
      %855 = vmatprep.subr.mxu0 0.0
      %856 = vmatpush1.msra.mxu0 0.0
      %857 = vmatprep.subr.mxu0 0.0
      %858 = vmatpush1.msra.mxu0 0.0
      %859 = vmatprep.subr.mxu0 0.0
      %860 = vmatpush1.msra.mxu0 0.0
      %861 = vmatprep.subr.mxu0 0.0
      %862 = vmatpush1.msra.mxu0 0.0
      %863 = vmatprep.mubr.f32.mxu0 0.0
      %864 = vmatmul.mubr.f32.gmra.mrb[0].mxu0 %v480
      %v865 = vpop.f32.mrb[0].mxu0
      %v866 = vadd.f32 0.0, %v865
      %v867 = vpop.f32.mrb[0].mxu0
      %868 = vmatprep.mubr.f32.mxu0 0.0
      %869 = vmatmul.mubr.f32.gmra.mrb[0].mxu0 %v483
      %v870 = vpop.f32.mrb[0].mxu0
      %v871 = vadd.f32 0.0, %v870
      %v872 = vpop.f32.mrb[0].mxu0
      %873 = vdwg.mxu0
      %874 = vmatprep.subr.mxu0 0.0
      %875 = vmatpush1.msra.mxu0 %v457
      %876 = vmatprep.subr.mxu0 0.0
      %877 = vmatpush1.msra.mxu0 %v462
      %878 = vmatprep.subr.mxu0 0.0
      %879 = vmatpush1.msra.mxu0 0.0
      %880 = vmatprep.subr.mxu0 0.0
      %881 = vmatpush1.msra.mxu0 0.0
      %882 = vmatprep.subr.mxu0 0.0
      %883 = vmatpush1.msra.mxu0 0.0
      %884 = vmatprep.subr.mxu0 0.0
      %885 = vmatpush1.msra.mxu0 0.0
      %886 = vmatprep.subr.mxu0 0.0
      %887 = vmatpush1.msra.mxu0 0.0
      %888 = vmatprep.subr.mxu0 0.0
      %889 = vmatpush1.msra.mxu0 0.0
      %890 = vmatprep.subr.mxu0 0.0
      %891 = vmatpush1.msra.mxu0 0.0
      %892 = vmatprep.subr.mxu0 0.0
      %893 = vmatpush1.msra.mxu0 0.0
      %894 = vmatprep.subr.mxu0 0.0
      %895 = vmatpush1.msra.mxu0 0.0
      %896 = vmatprep.subr.mxu0 0.0
      %897 = vmatpush1.msra.mxu0 0.0
      %898 = vmatprep.subr.mxu0 0.0
      %899 = vmatpush1.msra.mxu0 0.0
      %900 = vmatprep.subr.mxu0 0.0
      %901 = vmatpush1.msra.mxu0 0.0
      %902 = vmatprep.subr.mxu0 0.0
      %903 = vmatpush1.msra.mxu0 0.0
      %904 = vmatprep.subr.mxu0 0.0
      %905 = vmatpush1.msra.mxu0 0.0
      %906 = vmatprep.subr.mxu0 0.0
      %907 = vmatpush1.msra.mxu0 0.0
      %908 = vmatprep.subr.mxu0 0.0
      %909 = vmatpush1.msra.mxu0 0.0
      %910 = vmatprep.subr.mxu0 0.0
      %911 = vmatpush1.msra.mxu0 0.0
      %912 = vmatprep.subr.mxu0 0.0
      %913 = vmatpush1.msra.mxu0 0.0
      %914 = vmatprep.subr.mxu0 0.0
      %915 = vmatpush1.msra.mxu0 0.0
      %916 = vmatprep.subr.mxu0 0.0
      %917 = vmatpush1.msra.mxu0 0.0
      %918 = vmatprep.subr.mxu0 0.0
      %919 = vmatpush1.msra.mxu0 0.0
      %920 = vmatprep.subr.mxu0 0.0
      %921 = vmatpush1.msra.mxu0 0.0
      %922 = vmatprep.subr.mxu0 0.0
      %923 = vmatpush1.msra.mxu0 0.0
      %924 = vmatprep.subr.mxu0 0.0
      %925 = vmatpush1.msra.mxu0 0.0
      %926 = vmatprep.subr.mxu0 0.0
      %927 = vmatpush1.msra.mxu0 0.0
      %928 = vmatprep.subr.mxu0 0.0
      %929 = vmatpush1.msra.mxu0 0.0
      %930 = vmatprep.subr.mxu0 0.0
      %931 = vmatpush1.msra.mxu0 0.0
      %932 = vmatprep.subr.mxu0 0.0
      %933 = vmatpush1.msra.mxu0 0.0
      %934 = vmatprep.subr.mxu0 0.0
      %935 = vmatpush1.msra.mxu0 0.0
      %936 = vmatprep.subr.mxu0 0.0
      %937 = vmatpush1.msra.mxu0 0.0
      %938 = vmatprep.mubr.f32.mxu0 0.0
      %939 = vmatmul.mubr.f32.gmra.mrb[0].mxu0 %v561
      %v940 = vpop.f32.mrb[0].mxu0
      %v941 = vadd.f32 0.0, %v940
      %v942 = vpop.f32.mrb[0].mxu0
      %943 = vmatprep.mubr.f32.mxu0 0.0
      %944 = vmatmul.mubr.f32.gmra.mrb[0].mxu0 %v564
      %v945 = vpop.f32.mrb[0].mxu0
      %v946 = vadd.f32 0.0, %v945
      %v947 = vpop.f32.mrb[0].mxu0
      %948 = vdwg.mxu0
      %v949 = vsub.f32 %v866, %v941
      %v950 = vsub.f32 %v871, %v946
      %951 = vst.msk [vmem:[%s226 + $0x20] sm:$0xff] %vm240, %v949
      %952 = vst.msk [vmem:[%s226 + $0x28] sm:$0xff] %vm240, %v950
      %953 = vmatprep.subr.mxu0 0.0
      %954 = vmatpush1.msra.mxu0 %v362
      %955 = vmatprep.subr.mxu0 0.0
      %956 = vmatpush1.msra.mxu0 %v367
      %957 = vmatprep.subr.mxu0 0.0
      %958 = vmatpush1.msra.mxu0 0.0
      %959 = vmatprep.subr.mxu0 0.0
      %960 = vmatpush1.msra.mxu0 0.0
      %961 = vmatprep.subr.mxu0 0.0
      %962 = vmatpush1.msra.mxu0 0.0
      %963 = vmatprep.subr.mxu0 0.0
      %964 = vmatpush1.msra.mxu0 0.0
      %965 = vmatprep.subr.mxu0 0.0
      %966 = vmatpush1.msra.mxu0 0.0
      %967 = vmatprep.subr.mxu0 0.0
      %968 = vmatpush1.msra.mxu0 0.0
      %969 = vmatprep.subr.mxu0 0.0
      %970 = vmatpush1.msra.mxu0 0.0
      %971 = vmatprep.subr.mxu0 0.0
      %972 = vmatpush1.msra.mxu0 0.0
      %973 = vmatprep.subr.mxu0 0.0
      %974 = vmatpush1.msra.mxu0 0.0
      %975 = vmatprep.subr.mxu0 0.0
      %976 = vmatpush1.msra.mxu0 0.0
      %977 = vmatprep.subr.mxu0 0.0
      %978 = vmatpush1.msra.mxu0 0.0
      %979 = vmatprep.subr.mxu0 0.0
      %980 = vmatpush1.msra.mxu0 0.0
      %981 = vmatprep.subr.mxu0 0.0
      %982 = vmatpush1.msra.mxu0 0.0
      %983 = vmatprep.subr.mxu0 0.0
      %984 = vmatpush1.msra.mxu0 0.0
      %985 = vmatprep.subr.mxu0 0.0
      %986 = vmatpush1.msra.mxu0 0.0
      %987 = vmatprep.subr.mxu0 0.0
      %988 = vmatpush1.msra.mxu0 0.0
      %989 = vmatprep.subr.mxu0 0.0
      %990 = vmatpush1.msra.mxu0 0.0
      %991 = vmatprep.subr.mxu0 0.0
      %992 = vmatpush1.msra.mxu0 0.0
      %993 = vmatprep.subr.mxu0 0.0
      %994 = vmatpush1.msra.mxu0 0.0
      %995 = vmatprep.subr.mxu0 0.0
      %996 = vmatpush1.msra.mxu0 0.0
      %997 = vmatprep.subr.mxu0 0.0
      %998 = vmatpush1.msra.mxu0 0.0
      %999 = vmatprep.subr.mxu0 0.0
      %1000 = vmatpush1.msra.mxu0 0.0
      %1001 = vmatprep.subr.mxu0 0.0
      %1002 = vmatpush1.msra.mxu0 0.0
      %1003 = vmatprep.subr.mxu0 0.0
      %1004 = vmatpush1.msra.mxu0 0.0
      %1005 = vmatprep.subr.mxu0 0.0
      %1006 = vmatpush1.msra.mxu0 0.0
      %1007 = vmatprep.subr.mxu0 0.0
      %1008 = vmatpush1.msra.mxu0 0.0
      %1009 = vmatprep.subr.mxu0 0.0
      %1010 = vmatpush1.msra.mxu0 0.0
      %1011 = vmatprep.subr.mxu0 0.0
      %1012 = vmatpush1.msra.mxu0 0.0
      %1013 = vmatprep.subr.mxu0 0.0
      %1014 = vmatpush1.msra.mxu0 0.0
      %1015 = vmatprep.subr.mxu0 0.0
      %1016 = vmatpush1.msra.mxu0 0.0
      %1017 = vmatprep.mubr.f32.mxu0 0.0
      %1018 = vmatmul.mubr.f32.gmra.mrb[0].mxu0 %v480
      %v1019 = vpop.f32.mrb[0].mxu0
      %v1020 = vadd.f32 0.0, %v1019
      %v1021 = vpop.f32.mrb[0].mxu0
      %1022 = vmatprep.mubr.f32.mxu0 0.0
      %1023 = vmatmul.mubr.f32.gmra.mrb[0].mxu0 %v483
      %v1024 = vpop.f32.mrb[0].mxu0
      %v1025 = vadd.f32 0.0, %v1024
      %v1026 = vpop.f32.mrb[0].mxu0
      %1027 = vdwg.mxu0
      %1028 = vmatprep.subr.mxu0 0.0
      %1029 = vmatpush1.msra.mxu0 %v467
      %1030 = vmatprep.subr.mxu0 0.0
      %1031 = vmatpush1.msra.mxu0 %v472
      %1032 = vmatprep.subr.mxu0 0.0
      %1033 = vmatpush1.msra.mxu0 0.0
      %1034 = vmatprep.subr.mxu0 0.0
      %1035 = vmatpush1.msra.mxu0 0.0
      %1036 = vmatprep.subr.mxu0 0.0
      %1037 = vmatpush1.msra.mxu0 0.0
      %1038 = vmatprep.subr.mxu0 0.0
      %1039 = vmatpush1.msra.mxu0 0.0
      %1040 = vmatprep.subr.mxu0 0.0
      %1041 = vmatpush1.msra.mxu0 0.0
      %1042 = vmatprep.subr.mxu0 0.0
      %1043 = vmatpush1.msra.mxu0 0.0
      %1044 = vmatprep.subr.mxu0 0.0
      %1045 = vmatpush1.msra.mxu0 0.0
      %1046 = vmatprep.subr.mxu0 0.0
      %1047 = vmatpush1.msra.mxu0 0.0
      %1048 = vmatprep.subr.mxu0 0.0
      %1049 = vmatpush1.msra.mxu0 0.0
      %1050 = vmatprep.subr.mxu0 0.0
      %1051 = vmatpush1.msra.mxu0 0.0
      %1052 = vmatprep.subr.mxu0 0.0
      %1053 = vmatpush1.msra.mxu0 0.0
      %1054 = vmatprep.subr.mxu0 0.0
      %1055 = vmatpush1.msra.mxu0 0.0
      %1056 = vmatprep.subr.mxu0 0.0
      %1057 = vmatpush1.msra.mxu0 0.0
      %1058 = vmatprep.subr.mxu0 0.0
      %1059 = vmatpush1.msra.mxu0 0.0
      %1060 = vmatprep.subr.mxu0 0.0
      %1061 = vmatpush1.msra.mxu0 0.0
      %1062 = vmatprep.subr.mxu0 0.0
      %1063 = vmatpush1.msra.mxu0 0.0
      %1064 = vmatprep.subr.mxu0 0.0
      %1065 = vmatpush1.msra.mxu0 0.0
      %1066 = vmatprep.subr.mxu0 0.0
      %1067 = vmatpush1.msra.mxu0 0.0
      %1068 = vmatprep.subr.mxu0 0.0
      %1069 = vmatpush1.msra.mxu0 0.0
      %1070 = vmatprep.subr.mxu0 0.0
      %1071 = vmatpush1.msra.mxu0 0.0
      %1072 = vmatprep.subr.mxu0 0.0
      %1073 = vmatpush1.msra.mxu0 0.0
      %1074 = vmatprep.subr.mxu0 0.0
      %1075 = vmatpush1.msra.mxu0 0.0
      %1076 = vmatprep.subr.mxu0 0.0
      %1077 = vmatpush1.msra.mxu0 0.0
      %1078 = vmatprep.subr.mxu0 0.0
      %1079 = vmatpush1.msra.mxu0 0.0
      %1080 = vmatprep.subr.mxu0 0.0
      %1081 = vmatpush1.msra.mxu0 0.0
      %1082 = vmatprep.subr.mxu0 0.0
      %1083 = vmatpush1.msra.mxu0 0.0
      %1084 = vmatprep.subr.mxu0 0.0
      %1085 = vmatpush1.msra.mxu0 0.0
      %1086 = vmatprep.subr.mxu0 0.0
      %1087 = vmatpush1.msra.mxu0 0.0
      %1088 = vmatprep.subr.mxu0 0.0
      %1089 = vmatpush1.msra.mxu0 0.0
      %1090 = vmatprep.subr.mxu0 0.0
      %1091 = vmatpush1.msra.mxu0 0.0
      %1092 = vmatprep.mubr.f32.mxu0 0.0
      %1093 = vmatmul.mubr.f32.gmra.mrb[0].mxu0 %v561
      %v1094 = vpop.f32.mrb[0].mxu0
      %v1095 = vadd.f32 0.0, %v1094
      %v1096 = vpop.f32.mrb[0].mxu0
      %1097 = vmatprep.mubr.f32.mxu0 0.0
      %1098 = vmatmul.mubr.f32.gmra.mrb[0].mxu0 %v564
      %v1099 = vpop.f32.mrb[0].mxu0
      %v1100 = vadd.f32 0.0, %v1099
      %v1101 = vpop.f32.mrb[0].mxu0
      %1102 = vdwg.mxu0
      %v1103 = vsub.f32 %v1020, %v1095
      %v1104 = vsub.f32 %v1025, %v1100
      %1105 = vst.msk [vmem:[%s226 + $0x30] sm:$0xff] %vm240, %v1103
      %1106 = vst.msk [vmem:[%s226 + $0x38] sm:$0xff] %vm240, %v1104
      %s1107 = smul.u32 8, %s16
      %p1108 = scmp.lt.s32.totalorder %s1107, 23
      %s1109 = scalar_select %p1108, %s1107, 23
      %s1110 = smul.addr %s1109, 8
      %s1111 = scalar_lea.vmem %s5, %s1110
      // Predicated region
      $region41: #{tpu_custom_call.1} parent=39 // pred_check
        %p1112 = pneg %p144
      $region42: #{tpu_custom_call.1} parent=39 // pred_check_branch
        %1114 = sbr.rel (%p1112) target = $region44
      $region43: #{tpu_custom_call.1} parent=39 // pred_region
        %s1115 = smul.u32 8, %s16
      $region44: #{tpu_custom_call.1} parent=39 // pred_fallthru
        _
    $region40: #{tpu_custom_call.1} parent=5 // pred_fallthru
      _
    %p1116 = scmp.le.s32.totalorder 2, %s11
    // Predicated region
    $region45: #{tpu_custom_call.1} parent=5 // pred_check
      %p1117 = pneg %p1116
    $region46: #{tpu_custom_call.1} parent=5 // pred_check_branch
      %1119 = sbr.rel (%p1117) target = $region48
    $region47: #{tpu_custom_call.1} parent=5 // pred_region
      %s1120 = ssub.s32 %s11, 2
      // Predicated region
      $region49: #{tpu_custom_call.1} parent=47 // pred_check
        %p1121 = pneg %p150
      $region50: #{tpu_custom_call.1} parent=47 // pred_check_branch
        %1123 = sbr.rel (%p1121) target = $region52
      $region51: #{tpu_custom_call.1} parent=47 // pred_region
        %s1124 = smul.u32 8, %s17
        %p1125 = scmp.lt.s32.totalorder %s1124, 23
        %s1126 = scalar_select %p1125, %s1124, 23
        %s1127 = smul.addr %s1126, 8
        %s1128 = scalar_lea.vmem %s5, %s1127
      $region52: #{tpu_custom_call.1} parent=47 // pred_fallthru
        _
    $region48: #{tpu_custom_call.1} parent=5 // pred_fallthru
      _
  $region6: #{tpu_custom_call.1} parent=0 // loop_footer
    %s15 = sadd.s32 1, %s11
  $region7: #{tpu_custom_call.1} parent=0 // loop_footer_branch
    %10 = sbr.rel target = $region3
  $region8: #{tpu_custom_call.1} parent=0 // loop_exit
    _

</llo_original>
